<compile_context>
chip_gen: v7x
topology: tpu7x:2x2x1
jax: 0.10.0
libtpu: 0.0.40
codegen_flags: <defaults>
</compile_context>

<pallas_src>
import functools

import jax
import jax.numpy as jnp
from jax.experimental import pallas as pl
from jax.experimental.pallas import tpu as pltpu


def _round_up(x, m):
    return ((x + m - 1) // m) * m


# ----------------------------------------------------------------------------
# Fused Pallas kernel: the whole MLP + both heads for one batch tile.
# ----------------------------------------------------------------------------
def _fused_mlp_kernel(*refs, num_relu_layers):
    # refs = [x, (w, b) * num_relu_layers, w_final, b_final,
    #         w_head, b_head, var_mask, out]
    x_ref = refs[0]
    o_ref = refs[-1]
    mask_ref = refs[-2]
    p = refs[1:-2]

    z = x_ref[...]
    idx = 0
    # Hidden AnchoredBatch layers + ReLU (dropout_prob = 0.0 -> identity).
    for _ in range(num_relu_layers):
        w = p[idx][...]
        b = p[idx + 1][...]
        idx += 2
        z = jnp.maximum(
            jnp.dot(z, w, preferred_element_type=jnp.float32) + b, 0.0)
    # Final AnchoredBatch layer (no activation).
    w = p[idx][...]
    b = p[idx + 1][...]
    idx += 2
    z = jnp.dot(z, w, preferred_element_type=jnp.float32) + b
    # Merged, zero-padded mean/var head: columns [0, E) = means,
    # [E, 2E) = vars, [2E, 128) = structural zeros.  Softplus (logaddexp)
    # rides the EUP slot; var_mask is a precomputed constant (no iota/mod).
    w = p[idx][...]
    b = p[idx + 1][...]
    y = jnp.dot(z, w, preferred_element_type=jnp.float32) + b
    y = jnp.where(mask_ref[...] > 0.0, jnp.logaddexp(y, 0.0), y)
    o_ref[...] = y.astype(o_ref.dtype)


# ----------------------------------------------------------------------------
# Weight re-layout (run ONCE at parameter-load time, not per forward call).
# ----------------------------------------------------------------------------
def _fold_first_layer(w, b):
    """Shared-input (expand=True) first layer: (E,Fin,H),(E,1,H) -> (Fin,E*H),(1,E*H)."""
    e, fin, h = w.shape
    w_flat = jnp.transpose(w, (1, 0, 2)).reshape(fin, e * h)
    b_flat = jnp.transpose(b, (1, 0, 2)).reshape(1, e * h)
    return w_flat, b_flat


def _block_diag(w, b):
    """Per-member layer: (E,F,G),(E,1,G) -> block-diag (E*F,E*G) and (1,E*G)."""
    e, f, g = w.shape
    eye = jnp.eye(e, dtype=w.dtype)
    w_bd = (eye[:, None, :, None] * w[:, :, None, :]).reshape(e * f, e * g)
    b_flat = jnp.transpose(b, (1, 0, 2)).reshape(1, e * g)
    return w_bd, b_flat


def prepare_params(params):
    """Fold per-member weights into lane-dense matrices.  Call once."""
    stack, (mw, mb), (vw, vb) = params
    e = stack[0][0].shape[0]

    layers = [_fold_first_layer(*stack[0])]
    for w, b in stack[1:]:
        layers.append(_block_diag(w, b))

    # Heads: [all means | all vars], zero-padded to a lane-dense 128 columns.
    wm, bm = _block_diag(mw, mb)          # (E*H, E), (1, E)
    wv, bv = _block_diag(vw, vb)          # (E*H, E), (1, E)
    w_head = jnp.concatenate([wm, wv], axis=1)   # (E*H, 2E)
    b_head = jnp.concatenate([bm, bv], axis=1)   # (1, 2E)
    out_pad = max(128, _round_up(2 * e, 128))
    w_head = jnp.pad(w_head, ((0, 0), (0, out_pad - 2 * e)))
    b_head = jnp.pad(b_head, ((0, 0), (0, out_pad - 2 * e)))
    var_mask = jnp.zeros((1, out_pad), jnp.float32).at[0, e:2 * e].set(1.0)

    return {"layers": layers, "w_head": w_head, "b_head": b_head,
            "var_mask": var_mask}


# ----------------------------------------------------------------------------
# Forward pass (mirrors AnchoredBatchEnsemble.forward; expand=True input)
# ----------------------------------------------------------------------------
def anchored_batch_ensemble_forward(folded, x, *, ensemble_size, tile_b=256):
    layers = folded["layers"]
    w_head = folded["w_head"]
    b_head = folded["b_head"]
    var_mask = folded["var_mask"]
    e = ensemble_size
    out_pad = w_head.shape[1]

    batch, fin = x.shape
    # Batch tile: <=256 rows (fills the 256-row MXU pass on v6e/v7x, exact
    # 2x128 passes on v5e), multiple of 8 sublanes, padded if needed.
    tile_b = min(tile_b, _round_up(batch, 8))
    b_pad = _round_up(batch, tile_b)
    if b_pad != batch:
        x = jnp.pad(x, ((0, b_pad - batch), (0, 0)))

    num_relu = len(layers) - 1
    pinned = lambda shape: pl.BlockSpec(shape, lambda i: (0, 0))

    flat_inputs = [x]
    in_specs = [pl.BlockSpec((tile_b, fin), lambda i: (i, 0))]
    for w, b in layers:
        flat_inputs += [w, b]
        in_specs += [pinned(w.shape), pinned(b.shape)]
    flat_inputs += [w_head, b_head, var_mask]
    in_specs += [pinned(w_head.shape), pinned(b_head.shape),
                 pinned(var_mask.shape)]

    kernel = functools.partial(_fused_mlp_kernel, num_relu_layers=num_relu)
    out = pl.pallas_call(
        kernel,
        out_shape=jax.ShapeDtypeStruct((b_pad, out_pad), jnp.float32),
        grid=(b_pad // tile_b,),
        in_specs=in_specs,
        out_specs=pl.BlockSpec((tile_b, out_pad), lambda i: (i, 0)),
        compiler_params=pltpu.CompilerParams(
            dimension_semantics=("parallel",)),
    )(*flat_inputs)

    # (B_pad, 128) -> strip batch/lane padding -> mean (E, B, 1), var (E, B, 1)
    out = out[:batch]
    mean = jnp.transpose(out[:, :e])[..., None]
    var = jnp.transpose(out[:, e:2 * e])[..., None]
    return mean, var


# ----------------------------------------------------------------------------
# Parameter construction (deterministic, shapes from the module's __init__)
# ----------------------------------------------------------------------------
def init_params(key, ensemble_size, input_shape, hidden_layers, hidden_units):
    """Per-member weight (E, Fin, Fout), bias (E, 1, Fout) for every layer."""
    def layer(k, fin, fout):
        kw, kb = jax.random.split(k)
        scale = 1.0 / jnp.sqrt(jnp.float32(fin))  # fan_in init
        w = jax.random.normal(kw, (ensemble_size, fin, fout), jnp.float32) * scale
        b = jax.random.normal(kb, (ensemble_size, 1, fout), jnp.float32) * scale
        return w, b

    dims = [(input_shape, hidden_units)]
    dims += [(hidden_units, hidden_units)] * (hidden_layers - 1)
    dims += [(hidden_units, hidden_units)]  # final AnchoredBatch (no ReLU)

    keys = jax.random.split(key, len(dims) + 2)
    stack = [layer(keys[i], fi, fo) for i, (fi, fo) in enumerate(dims)]
    mean_head = layer(keys[-2], hidden_units, 1)
    var_head = layer(keys[-1], hidden_units, 1)
    return stack, mean_head, var_head


# ----------------------------------------------------------------------------
# Pure-JAX reference for a correctness check.
# ----------------------------------------------------------------------------
def reference_forward(params, x, ensemble_size):
    stack, (mw, mb), (vw, vb) = params
    z = jnp.broadcast_to(x[None], (ensemble_size,) + x.shape)
    for w, b in stack[:-1]:
        z = jnp.maximum(jnp.einsum("ebi,eio->ebo", z, w) + b, 0.0)
    w, b = stack[-1]
    z = jnp.einsum("ebi,eio->ebo", z, w) + b
    mean = jnp.einsum("ebi,eio->ebo", z, mw) + mb
    var = jax.nn.softplus(jnp.einsum("ebi,eio->ebo", z, vw) + vb)
    return mean, var


if __name__ == "__main__":
    ensemble_size = 4
    input_shape = 8
    hidden_layers = 2
    hidden_units = 32    # E * h = 128 -> one lane-dense matmul per layer
    batch = 16

    key = jax.random.PRNGKey(0)
    k_params, k_x = jax.random.split(key)
    params = init_params(k_params, ensemble_size, input_shape,
                         hidden_layers, hidden_units)
    x = jax.random.normal(k_x, (batch, input_shape), jnp.float32)

    # Weight folding happens once, off the per-call critical path.
    folded = prepare_params(params)

    fwd = jax.jit(anchored_batch_ensemble_forward,
                  static_argnames=("ensemble_size", "tile_b"))
    mean, var = fwd(folded, x, ensemble_size=ensemble_size)
    mean = jax.block_until_ready(mean)
    var = jax.block_until_ready(var)

    # Sanity check against pure-JAX reference.
    ref_mean, ref_var = reference_forward(params, x, ensemble_size)
    assert mean.shape == (ensemble_size, batch, 1)
    assert var.shape == (ensemble_size, batch, 1)
    assert jnp.allclose(mean, ref_mean, atol=1e-4, rtol=1e-4)
    assert jnp.allclose(var, ref_var, atol=1e-4, rtol=1e-4)
    assert bool(jnp.all(var >= 0.0))

    print("KERNEL_OK")
</pallas_src>

<mosaic_0001>
module attributes {stable_mosaic.version = 11 : i64} {
  func.func @_fused_mlp_kernel(%arg0: i32, %arg1: memref<16x8xf32, #tpu.memory_space<vmem>>, %arg2: memref<8x128xf32, #tpu.memory_space<vmem>>, %arg3: memref<1x128xf32, #tpu.memory_space<vmem>>, %arg4: memref<128x128xf32, #tpu.memory_space<vmem>>, %arg5: memref<1x128xf32, #tpu.memory_space<vmem>>, %arg6: memref<128x128xf32, #tpu.memory_space<vmem>>, %arg7: memref<1x128xf32, #tpu.memory_space<vmem>>, %arg8: memref<128x128xf32, #tpu.memory_space<vmem>>, %arg9: memref<1x128xf32, #tpu.memory_space<vmem>>, %arg10: memref<1x128xf32, #tpu.memory_space<vmem>>, %arg11: memref<16x128xf32, #tpu.memory_space<vmem>>) attributes {dimension_semantics = [#tpu.dimension_semantics<parallel>], iteration_bounds = array<i64: 1>, scalar_prefetch = 0 : i64, scratch_operands = 0 : i64, tpu.core_type = #tpu.core_type<tc>, window_params = [{transform_indices = @transform_0, window_bounds = array<i64: 16, 8>}, {pipeline_mode = #tpu.pipeline_mode<synchronous>, transform_indices = @transform_1, window_bounds = array<i64: 8, 128>}, {pipeline_mode = #tpu.pipeline_mode<synchronous>, transform_indices = @transform_2, window_bounds = array<i64: 1, 128>}, {pipeline_mode = #tpu.pipeline_mode<synchronous>, transform_indices = @transform_3, window_bounds = array<i64: 128, 128>}, {pipeline_mode = #tpu.pipeline_mode<synchronous>, transform_indices = @transform_4, window_bounds = array<i64: 1, 128>}, {pipeline_mode = #tpu.pipeline_mode<synchronous>, transform_indices = @transform_5, window_bounds = array<i64: 128, 128>}, {pipeline_mode = #tpu.pipeline_mode<synchronous>, transform_indices = @transform_6, window_bounds = array<i64: 1, 128>}, {pipeline_mode = #tpu.pipeline_mode<synchronous>, transform_indices = @transform_7, window_bounds = array<i64: 128, 128>}, {pipeline_mode = #tpu.pipeline_mode<synchronous>, transform_indices = @transform_8, window_bounds = array<i64: 1, 128>}, {pipeline_mode = #tpu.pipeline_mode<synchronous>, transform_indices = @transform_9, window_bounds = array<i64: 1, 128>}, {transform_indices = @transform_10, window_bounds = array<i64: 16, 128>}]} {
    %c0 = arith.constant 0 : index
    %c0_0 = arith.constant 0 : index
    %0 = vector.load %arg1[%c0, %c0_0] : memref<16x8xf32, #tpu.memory_space<vmem>>, vector<16x8xf32>
    %c0_1 = arith.constant 0 : index
    %c0_2 = arith.constant 0 : index
    %1 = vector.load %arg2[%c0_1, %c0_2] : memref<8x128xf32, #tpu.memory_space<vmem>>, vector<8x128xf32>
    %c0_3 = arith.constant 0 : index
    %c0_4 = arith.constant 0 : index
    %2 = vector.load %arg3[%c0_3, %c0_4] : memref<1x128xf32, #tpu.memory_space<vmem>>, vector<1x128xf32>
    %cst = arith.constant dense<0.000000e+00> : vector<16x128xf32>
    %3 = tpu.matmul %0, %1, %cst {dimension_numbers = #tpu.dot_dimension_numbers<[1], [0], [0], [1], [0, 0, 1, 1], [], []>} : vector<16x8xf32>, vector<8x128xf32>, vector<16x128xf32> -> vector<16x128xf32>
    %4 = vector.broadcast %2 : vector<1x128xf32> to vector<16x128xf32>
    %5 = arith.addf %3, %4 : vector<16x128xf32>
    %cst_5 = arith.constant 0.000000e+00 : f32
    %6 = vector.broadcast %cst_5 : f32 to vector<16x128xf32>
    %7 = arith.maximumf %5, %6 : vector<16x128xf32>
    %c0_6 = arith.constant 0 : index
    %c0_7 = arith.constant 0 : index
    %8 = vector.load %arg4[%c0_6, %c0_7] : memref<128x128xf32, #tpu.memory_space<vmem>>, vector<128x128xf32>
    %c0_8 = arith.constant 0 : index
    %c0_9 = arith.constant 0 : index
    %9 = vector.load %arg5[%c0_8, %c0_9] : memref<1x128xf32, #tpu.memory_space<vmem>>, vector<1x128xf32>
    %cst_10 = arith.constant dense<0.000000e+00> : vector<16x128xf32>
    %10 = tpu.matmul %7, %8, %cst_10 {dimension_numbers = #tpu.dot_dimension_numbers<[1], [0], [0], [1], [0, 0, 1, 1], [], []>} : vector<16x128xf32>, vector<128x128xf32>, vector<16x128xf32> -> vector<16x128xf32>
    %11 = vector.broadcast %9 : vector<1x128xf32> to vector<16x128xf32>
    %12 = arith.addf %10, %11 : vector<16x128xf32>
    %cst_11 = arith.constant 0.000000e+00 : f32
    %13 = vector.broadcast %cst_11 : f32 to vector<16x128xf32>
    %14 = arith.maximumf %12, %13 : vector<16x128xf32>
    %c0_12 = arith.constant 0 : index
    %c0_13 = arith.constant 0 : index
    %15 = vector.load %arg6[%c0_12, %c0_13] : memref<128x128xf32, #tpu.memory_space<vmem>>, vector<128x128xf32>
    %c0_14 = arith.constant 0 : index
    %c0_15 = arith.constant 0 : index
    %16 = vector.load %arg7[%c0_14, %c0_15] : memref<1x128xf32, #tpu.memory_space<vmem>>, vector<1x128xf32>
    %cst_16 = arith.constant dense<0.000000e+00> : vector<16x128xf32>
    %17 = tpu.matmul %14, %15, %cst_16 {dimension_numbers = #tpu.dot_dimension_numbers<[1], [0], [0], [1], [0, 0, 1, 1], [], []>} : vector<16x128xf32>, vector<128x128xf32>, vector<16x128xf32> -> vector<16x128xf32>
    %18 = vector.broadcast %16 : vector<1x128xf32> to vector<16x128xf32>
    %19 = arith.addf %17, %18 : vector<16x128xf32>
    %c0_17 = arith.constant 0 : index
    %c0_18 = arith.constant 0 : index
    %20 = vector.load %arg8[%c0_17, %c0_18] : memref<128x128xf32, #tpu.memory_space<vmem>>, vector<128x128xf32>
    %c0_19 = arith.constant 0 : index
    %c0_20 = arith.constant 0 : index
    %21 = vector.load %arg9[%c0_19, %c0_20] : memref<1x128xf32, #tpu.memory_space<vmem>>, vector<1x128xf32>
    %cst_21 = arith.constant dense<0.000000e+00> : vector<16x128xf32>
    %22 = tpu.matmul %19, %20, %cst_21 {dimension_numbers = #tpu.dot_dimension_numbers<[1], [0], [0], [1], [0, 0, 1, 1], [], []>} : vector<16x128xf32>, vector<128x128xf32>, vector<16x128xf32> -> vector<16x128xf32>
    %23 = vector.broadcast %21 : vector<1x128xf32> to vector<16x128xf32>
    %24 = arith.addf %22, %23 : vector<16x128xf32>
    %c0_22 = arith.constant 0 : index
    %c0_23 = arith.constant 0 : index
    %25 = vector.load %arg10[%c0_22, %c0_23] : memref<1x128xf32, #tpu.memory_space<vmem>>, vector<1x128xf32>
    %cst_24 = arith.constant 0.000000e+00 : f32
    %26 = vector.broadcast %cst_24 : f32 to vector<1x128xf32>
    %27 = arith.cmpf ogt, %25, %26 : vector<1x128xf32>
    %cst_25 = arith.constant 0.000000e+00 : f32
    %28 = vector.broadcast %cst_25 : f32 to vector<16x128xf32>
    %29 = arith.maximumf %24, %28 : vector<16x128xf32>
    %30 = vector.broadcast %cst_25 : f32 to vector<16x128xf32>
    %31 = arith.subf %24, %30 : vector<16x128xf32>
    %32 = arith.cmpf one, %31, %31 : vector<16x128xf32>
    %33 = vector.broadcast %cst_25 : f32 to vector<16x128xf32>
    %34 = arith.addf %24, %33 : vector<16x128xf32>
    %35 = math.absf %31 : vector<16x128xf32>
    %cst_26 = arith.constant 0.000000e+00 : f32
    %36 = vector.broadcast %cst_26 : f32 to vector<16x128xf32>
    %37 = arith.subf %36, %35 : vector<16x128xf32>
    %38 = math.exp %37 : vector<16x128xf32>
    %39 = math.log1p %38 : vector<16x128xf32>
    %40 = arith.addf %29, %39 : vector<16x128xf32>
    %41 = arith.select %32, %34, %40 : vector<16x128xi1>, vector<16x128xf32>
    %42 = vector.shape_cast %27 : vector<1x128xi1> to vector<1x128xi1>
    %43 = vector.broadcast %42 : vector<1x128xi1> to vector<16x128xi1>
    %44 = arith.select %43, %41, %24 : vector<16x128xi1>, vector<16x128xf32>
    %c0_27 = arith.constant 0 : index
    %c0_28 = arith.constant 0 : index
    %45 = vector.load %arg11[%c0_27, %c0_28] : memref<16x128xf32, #tpu.memory_space<vmem>>, vector<16x128xf32>
    tpu.vector_store %arg11[%c0_27, %c0_28], %44 {strides = array<i32>} : memref<16x128xf32, #tpu.memory_space<vmem>>, vector<16x128xf32>,
    return
  }
  func.func @transform_0(%arg0: i32) -> (i32, i32) {
    %c0_i32 = arith.constant 0 : i32
    %c0_i32_0 = arith.constant 0 : i32
    return %arg0, %c0_i32 : i32, i32
  }
  func.func @transform_1(%arg0: i32) -> (i32, i32) {
    %c0_i32 = arith.constant 0 : i32
    %c0_i32_0 = arith.constant 0 : i32
    %c0_i32_1 = arith.constant 0 : i32
    return %c0_i32, %c0_i32_0 : i32, i32
  }
  func.func @transform_2(%arg0: i32) -> (i32, i32) {
    %c0_i32 = arith.constant 0 : i32
    %c0_i32_0 = arith.constant 0 : i32
    %c0_i32_1 = arith.constant 0 : i32
    return %c0_i32, %c0_i32_0 : i32, i32
  }
  func.func @transform_3(%arg0: i32) -> (i32, i32) {
    %c0_i32 = arith.constant 0 : i32
    %c0_i32_0 = arith.constant 0 : i32
    %c0_i32_1 = arith.constant 0 : i32
    return %c0_i32, %c0_i32_0 : i32, i32
  }
  func.func @transform_4(%arg0: i32) -> (i32, i32) {
    %c0_i32 = arith.constant 0 : i32
    %c0_i32_0 = arith.constant 0 : i32
    %c0_i32_1 = arith.constant 0 : i32
    return %c0_i32, %c0_i32_0 : i32, i32
  }
  func.func @transform_5(%arg0: i32) -> (i32, i32) {
    %c0_i32 = arith.constant 0 : i32
    %c0_i32_0 = arith.constant 0 : i32
    %c0_i32_1 = arith.constant 0 : i32
    return %c0_i32, %c0_i32_0 : i32, i32
  }
  func.func @transform_6(%arg0: i32) -> (i32, i32) {
    %c0_i32 = arith.constant 0 : i32
    %c0_i32_0 = arith.constant 0 : i32
    %c0_i32_1 = arith.constant 0 : i32
    return %c0_i32, %c0_i32_0 : i32, i32
  }
  func.func @transform_7(%arg0: i32) -> (i32, i32) {
    %c0_i32 = arith.constant 0 : i32
    %c0_i32_0 = arith.constant 0 : i32
    %c0_i32_1 = arith.constant 0 : i32
    return %c0_i32, %c0_i32_0 : i32, i32
  }
  func.func @transform_8(%arg0: i32) -> (i32, i32) {
    %c0_i32 = arith.constant 0 : i32
    %c0_i32_0 = arith.constant 0 : i32
    %c0_i32_1 = arith.constant 0 : i32
    return %c0_i32, %c0_i32_0 : i32, i32
  }
  func.func @transform_9(%arg0: i32) -> (i32, i32) {
    %c0_i32 = arith.constant 0 : i32
    %c0_i32_0 = arith.constant 0 : i32
    %c0_i32_1 = arith.constant 0 : i32
    return %c0_i32, %c0_i32_0 : i32, i32
  }
  func.func @transform_10(%arg0: i32) -> (i32, i32) {
    %c0_i32 = arith.constant 0 : i32
    %c0_i32_0 = arith.constant 0 : i32
    return %arg0, %c0_i32 : i32, i32
  }
}

</mosaic_0001>

<llo_original>
// kernel: anchored_batch_ensemble_forward.1
$region0: #{anchored_batch_ensemble_forward.1}
  #allocation0 [shape = 'u32[]', space=smem, size = 0x4, offset = 0x4, fixed_abs, tag = 'smem constant byte address 0x4 - core index']
  #allocation1 [shape = 'u32[144,128]{1,0:T(1,128)}', space=vmem, size = 0x12000, scoped, tag = 'internal scratch']
  %s0 = inlined_call_operand.vmem [shape: f32[16,8], index: 0, kind: input, shape index: {}]
  %s1 = inlined_call_operand.vmem [shape: f32[8,128], index: 1, kind: input, shape index: {}]
  %s2 = inlined_call_operand.vmem [shape: f32[1,128], index: 2, kind: input, shape index: {}]
  %s3 = inlined_call_operand.hbm [shape: f32[128,128], index: 3, kind: input, shape index: {}]
  %s4 = inlined_call_operand.vmem [shape: f32[1,128], index: 4, kind: input, shape index: {}]
  %s5 = inlined_call_operand.hbm [shape: f32[128,128], index: 5, kind: input, shape index: {}]
  %s6 = inlined_call_operand.vmem [shape: f32[1,128], index: 6, kind: input, shape index: {}]
  %s7 = inlined_call_operand.hbm [shape: f32[128,128], index: 7, kind: input, shape index: {}]
  %s8 = inlined_call_operand.vmem [shape: f32[1,128], index: 8, kind: input, shape index: {}]
  %s9 = inlined_call_operand.vmem [shape: f32[1,128], index: 9, kind: input, shape index: {}]
  %s10 = inlined_call_operand.vmem [shape: f32[16,128], index: 10, kind: output, shape index: {}]
  %s11 = sld [smem:[#allocation0]]
  $region62: #{anchored_batch_ensemble_forward.1} parent=0
    _
  %s13 = ssub.s32 1, %s11
  %s14 = scalar_select 0, %s13, %s11
  $region1: #{anchored_batch_ensemble_forward.1} parent=0
    #allocation2 [shape = 'u8[65536]{0}', space=vmem, size = 0x10000, scoped, tag = 'input window, operand 3, single buffered']
    #allocation3 [shape = 's32[1]{0}', space=sflag, size = 0x4, scoped, tag = 'scoped memory for anchored_batch_ensemble_forward.1']
    #allocation4 [shape = 'u8[65536]{0}', space=vmem, size = 0x10000, scoped, tag = 'input window, operand 5, single buffered']
    #allocation5 [shape = 's32[1]{0}', space=sflag, size = 0x4, scoped, tag = 'scoped memory for anchored_batch_ensemble_forward.1']
    #allocation6 [shape = 'u8[65536]{0}', space=vmem, size = 0x10000, scoped, tag = 'input window, operand 7, single buffered']
    %15 = vsyncpa [#allocation3], 0
    %16 = vsyncpa [#allocation5], 0
    // Predicated region
    $region2: #{anchored_batch_ensemble_forward.1} parent=1 // pred_check
      _
    $region3: #{anchored_batch_ensemble_forward.1} parent=1 // pred_check_branch
      %18 = sbr.rel (0) target = $region5
    $region4: #{anchored_batch_ensemble_forward.1} parent=1 // pred_region
      _
    $region5: #{anchored_batch_ensemble_forward.1} parent=1 // pred_fallthru
      _
    // Predicated region
    $region6: #{anchored_batch_ensemble_forward.1} parent=1 // pred_check
      _
    $region7: #{anchored_batch_ensemble_forward.1} parent=1 // pred_check_branch
      %20 = sbr.rel (0) target = $region9
    $region8: #{anchored_batch_ensemble_forward.1} parent=1 // pred_region
      _
    $region9: #{anchored_batch_ensemble_forward.1} parent=1 // pred_fallthru
      _
    // Predicated region
    $region10: #{anchored_batch_ensemble_forward.1} parent=1 // pred_check
      _
    $region11: #{anchored_batch_ensemble_forward.1} parent=1 // pred_check_branch
      %22 = sbr.rel (0) target = $region13
    $region12: #{anchored_batch_ensemble_forward.1} parent=1 // pred_region
      _
    $region13: #{anchored_batch_ensemble_forward.1} parent=1 // pred_fallthru
      _
    // Predicated region
    $region14: #{anchored_batch_ensemble_forward.1} parent=1 // pred_check
      _
    $region15: #{anchored_batch_ensemble_forward.1} parent=1 // pred_check_branch
      %24 = sbr.rel (0) target = $region17
    $region16: #{anchored_batch_ensemble_forward.1} parent=1 // pred_region
      %s26 = ssub.s32 2048, 2048
      %27 = vsyncadd [#allocation3], %s26
      %s28 = sshll.u32 [#allocation2], 4
      %s29 = int_to_ptr.vmem [resolvable:$true] %s28
      %34 = dma.hbm_to_vmem [thread:$0]  %s3, 2048, %s29, [#allocation3], 128, 128, 8
    $region17: #{anchored_batch_ensemble_forward.1} parent=1 // pred_fallthru
      _
    // Predicated region
    $region18: #{anchored_batch_ensemble_forward.1} parent=1 // pred_check
      _
    $region19: #{anchored_batch_ensemble_forward.1} parent=1 // pred_check_branch
      %36 = sbr.rel (0) target = $region21
    $region20: #{anchored_batch_ensemble_forward.1} parent=1 // pred_region
      _
    $region21: #{anchored_batch_ensemble_forward.1} parent=1 // pred_fallthru
      _
    // Predicated region
    $region22: #{anchored_batch_ensemble_forward.1} parent=1 // pred_check
      _
    $region23: #{anchored_batch_ensemble_forward.1} parent=1 // pred_check_branch
      %38 = sbr.rel (0) target = $region25
    $region24: #{anchored_batch_ensemble_forward.1} parent=1 // pred_region
      %s40 = ssub.s32 2048, 2048
      %41 = vsyncadd [#allocation5], %s40
      %s42 = sshll.u32 [#allocation4], 4
      %s43 = int_to_ptr.vmem [resolvable:$true] %s42
      %48 = dma.hbm_to_vmem [thread:$0]  %s5, 2048, %s43, [#allocation5], 128, 128, 8
    $region25: #{anchored_batch_ensemble_forward.1} parent=1 // pred_fallthru
      _
    // Predicated region
    $region26: #{anchored_batch_ensemble_forward.1} parent=1 // pred_check
      _
    $region27: #{anchored_batch_ensemble_forward.1} parent=1 // pred_check_branch
      %50 = sbr.rel (0) target = $region29
    $region28: #{anchored_batch_ensemble_forward.1} parent=1 // pred_region
      _
    $region29: #{anchored_batch_ensemble_forward.1} parent=1 // pred_fallthru
      _
    // Predicated region
    $region30: #{anchored_batch_ensemble_forward.1} parent=1 // pred_check
      _
    $region31: #{anchored_batch_ensemble_forward.1} parent=1 // pred_check_branch
      %52 = sbr.rel (0) target = $region33
    $region32: #{anchored_batch_ensemble_forward.1} parent=1 // pred_region
      %s54 = ssub.s32 2048, 2048
      %55 = vsyncadd [#allocation5], %s54
      %s56 = sshll.u32 [#allocation6], 4
      %s57 = int_to_ptr.vmem [resolvable:$true] %s56
      %62 = dma.hbm_to_vmem [thread:$0]  %s7, 2048, %s57, [#allocation5], 128, 128, 8
    $region33: #{anchored_batch_ensemble_forward.1} parent=1 // pred_fallthru
      _
    // Predicated region
    $region34: #{anchored_batch_ensemble_forward.1} parent=1 // pred_check
      _
    $region35: #{anchored_batch_ensemble_forward.1} parent=1 // pred_check_branch
      %64 = sbr.rel (0) target = $region37
    $region36: #{anchored_batch_ensemble_forward.1} parent=1 // pred_region
      _
    $region37: #{anchored_batch_ensemble_forward.1} parent=1 // pred_fallthru
      _
    // Predicated region
    $region38: #{anchored_batch_ensemble_forward.1} parent=1 // pred_check
      _
    $region39: #{anchored_batch_ensemble_forward.1} parent=1 // pred_check_branch
      %66 = sbr.rel (0) target = $region41
    $region40: #{anchored_batch_ensemble_forward.1} parent=1 // pred_region
      _
    $region41: #{anchored_batch_ensemble_forward.1} parent=1 // pred_fallthru
      _
    // Predicated region
    $region42: #{anchored_batch_ensemble_forward.1} parent=1 // pred_check
      _
    $region43: #{anchored_batch_ensemble_forward.1} parent=1 // pred_check_branch
      %68 = sbr.rel (0) target = $region45
    $region44: #{anchored_batch_ensemble_forward.1} parent=1 // pred_region
      %69 = dma.done [#allocation3], 2048
    $region45: #{anchored_batch_ensemble_forward.1} parent=1 // pred_fallthru
      _
    // Predicated region
    $region46: #{anchored_batch_ensemble_forward.1} parent=1 // pred_check
      _
    $region47: #{anchored_batch_ensemble_forward.1} parent=1 // pred_check_branch
      %71 = sbr.rel (0) target = $region49
    $region48: #{anchored_batch_ensemble_forward.1} parent=1 // pred_region
      %72 = dma.done [#allocation5], 2048
    $region49: #{anchored_batch_ensemble_forward.1} parent=1 // pred_fallthru
      _
    // Predicated region
    $region50: #{anchored_batch_ensemble_forward.1} parent=1 // pred_check
      _
    $region51: #{anchored_batch_ensemble_forward.1} parent=1 // pred_check_branch
      %74 = sbr.rel (0) target = $region53
    $region52: #{anchored_batch_ensemble_forward.1} parent=1 // pred_region
      %75 = dma.done [#allocation5], 2048
    $region53: #{anchored_batch_ensemble_forward.1} parent=1 // pred_fallthru
      _
    %v76 = vld [vmem:[%s0] sm:$0xff]
    %v77 = vld [vmem:[%s0 + $0x8] sm:$0xff]
    %v78 = vld [vmem:[%s1] sm:$0xff]
    %v79 = vld [vmem:[%s2] sm:$0x1]
    %v81 = vlaneseq
    %v82 = vshrl.u32 %v81, 7
    %v83 = vsub.s32 0, %v82
    %v84 = vrot.slane %v79, %v83
    %vm86 = vcmask 64512
    %v88 = vsel %vm86, %v76, 0
    %v91 = vsel %vm86, %v77, 0
    %93 = vmatprep.subr.mxu0 0.0
    %94 = vmatpush1.msra.mxu0 %v78
    %95 = vmatprep.subr.mxu0 0.0
    %96 = vmatpush1.msra.mxu0 0.0
    %97 = vmatprep.subr.mxu0 0.0
    %98 = vmatpush1.msra.mxu0 0.0
    %99 = vmatprep.subr.mxu0 0.0
    %100 = vmatpush1.msra.mxu0 0.0
    %101 = vmatprep.subr.mxu0 0.0
    %102 = vmatpush1.msra.mxu0 0.0
    %103 = vmatprep.subr.mxu0 0.0
    %104 = vmatpush1.msra.mxu0 0.0
    %105 = vmatprep.subr.mxu0 0.0
    %106 = vmatpush1.msra.mxu0 0.0
    %107 = vmatprep.subr.mxu0 0.0
    %108 = vmatpush1.msra.mxu0 0.0
    %109 = vmatprep.subr.mxu0 0.0
    %110 = vmatpush1.msra.mxu0 0.0
    %111 = vmatprep.subr.mxu0 0.0
    %112 = vmatpush1.msra.mxu0 0.0
    %113 = vmatprep.subr.mxu0 0.0
    %114 = vmatpush1.msra.mxu0 0.0
    %115 = vmatprep.subr.mxu0 0.0
    %116 = vmatpush1.msra.mxu0 0.0
    %117 = vmatprep.subr.mxu0 0.0
    %118 = vmatpush1.msra.mxu0 0.0
    %119 = vmatprep.subr.mxu0 0.0
    %120 = vmatpush1.msra.mxu0 0.0
    %121 = vmatprep.subr.mxu0 0.0
    %122 = vmatpush1.msra.mxu0 0.0
    %123 = vmatprep.subr.mxu0 0.0
    %124 = vmatpush1.msra.mxu0 0.0
    %125 = vmatprep.subr.mxu0 0.0
    %126 = vmatpush1.msra.mxu0 0.0
    %127 = vmatprep.subr.mxu0 0.0
    %128 = vmatpush1.msra.mxu0 0.0
    %129 = vmatprep.subr.mxu0 0.0
    %130 = vmatpush1.msra.mxu0 0.0
    %131 = vmatprep.subr.mxu0 0.0
    %132 = vmatpush1.msra.mxu0 0.0
    %133 = vmatprep.subr.mxu0 0.0
    %134 = vmatpush1.msra.mxu0 0.0
    %135 = vmatprep.subr.mxu0 0.0
    %136 = vmatpush1.msra.mxu0 0.0
    %137 = vmatprep.subr.mxu0 0.0
    %138 = vmatpush1.msra.mxu0 0.0
    %139 = vmatprep.subr.mxu0 0.0
    %140 = vmatpush1.msra.mxu0 0.0
    %141 = vmatprep.subr.mxu0 0.0
    %142 = vmatpush1.msra.mxu0 0.0
    %143 = vmatprep.subr.mxu0 0.0
    %144 = vmatpush1.msra.mxu0 0.0
    %145 = vmatprep.subr.mxu0 0.0
    %146 = vmatpush1.msra.mxu0 0.0
    %147 = vmatprep.subr.mxu0 0.0
    %148 = vmatpush1.msra.mxu0 0.0
    %149 = vmatprep.subr.mxu0 0.0
    %150 = vmatpush1.msra.mxu0 0.0
    %151 = vmatprep.subr.mxu0 0.0
    %152 = vmatpush1.msra.mxu0 0.0
    %153 = vmatprep.subr.mxu0 0.0
    %154 = vmatpush1.msra.mxu0 0.0
    %155 = vmatprep.subr.mxu0 0.0
    %156 = vmatpush1.msra.mxu0 0.0
    %157 = vmatprep.mubr.f32.mxu0 0.0
    %158 = vmatmul.mubr.f32.gmra.mrb[0].mxu0 %v88
    %v159 = vpop.f32.mrb[0].mxu0
    %v160 = vadd.f32 %v84, %v159
    %v161 = vpop.f32.mrb[0].mxu0
    %162 = vmatprep.mubr.f32.mxu0 0.0
    %163 = vmatmul.mubr.f32.gmra.mrb[0].mxu0 %v91
    %v164 = vpop.f32.mrb[0].mxu0
    %v165 = vadd.f32 %v84, %v164
    %v166 = vpop.f32.mrb[0].mxu0
    %167 = vdwg.mxu0
    %v168 = vmax.f32 %v160, 0.0
    %v169 = vmax.f32 %v165, 0.0
    %v170 = vld [vmem:[#allocation2] sm:$0xff]
    %v171 = vld [vmem:[#allocation2 + $0x8] sm:$0xff]
    %v172 = vld [vmem:[#allocation2 + $0x10] sm:$0xff]
    %v173 = vld [vmem:[#allocation2 + $0x18] sm:$0xff]
    %v174 = vld [vmem:[#allocation2 + $0x20] sm:$0xff]
    %v175 = vld [vmem:[#allocation2 + $0x28] sm:$0xff]
    %v176 = vld [vmem:[#allocation2 + $0x30] sm:$0xff]
    %v177 = vld [vmem:[#allocation2 + $0x38] sm:$0xff]
    %v178 = vld [vmem:[#allocation2 + $0x40] sm:$0xff]
    %v179 = vld [vmem:[#allocation2 + $0x48] sm:$0xff]
    %v180 = vld [vmem:[#allocation2 + $0x50] sm:$0xff]
    %v181 = vld [vmem:[#allocation2 + $0x58] sm:$0xff]
    %v182 = vld [vmem:[#allocation2 + $0x60] sm:$0xff]
    %v183 = vld [vmem:[#allocation2 + $0x68] sm:$0xff]
    %v184 = vld [vmem:[#allocation2 + $0x70] sm:$0xff]
    %v185 = vld [vmem:[#allocation2 + $0x78] sm:$0xff]
    %v186 = vld [vmem:[%s4] sm:$0x1]
    %v188 = vlaneseq
    %v189 = vshrl.u32 %v188, 7
    %v190 = vsub.s32 0, %v189
    %v191 = vrot.slane %v186, %v190
    %193 = vmatprep.subr.mxu0 0.0
    %194 = vmatpush1.msra.mxu0 %v170
    %195 = vmatprep.subr.mxu0 0.0
    %196 = vmatpush1.msra.mxu0 %v171
    %197 = vmatprep.subr.mxu0 0.0
    %198 = vmatpush1.msra.mxu0 %v172
    %199 = vmatprep.subr.mxu0 0.0
    %200 = vmatpush1.msra.mxu0 %v173
    %201 = vmatprep.subr.mxu0 0.0
    %202 = vmatpush1.msra.mxu0 %v174
    %203 = vmatprep.subr.mxu0 0.0
    %204 = vmatpush1.msra.mxu0 %v175
    %205 = vmatprep.subr.mxu0 0.0
    %206 = vmatpush1.msra.mxu0 %v176
    %207 = vmatprep.subr.mxu0 0.0
    %208 = vmatpush1.msra.mxu0 %v177
    %209 = vmatprep.subr.mxu0 0.0
    %210 = vmatpush1.msra.mxu0 %v178
    %211 = vmatprep.subr.mxu0 0.0
    %212 = vmatpush1.msra.mxu0 %v179
    %213 = vmatprep.subr.mxu0 0.0
    %214 = vmatpush1.msra.mxu0 %v180
    %215 = vmatprep.subr.mxu0 0.0
    %216 = vmatpush1.msra.mxu0 %v181
    %217 = vmatprep.subr.mxu0 0.0
    %218 = vmatpush1.msra.mxu0 %v182
    %219 = vmatprep.subr.mxu0 0.0
    %220 = vmatpush1.msra.mxu0 %v183
    %221 = vmatprep.subr.mxu0 0.0
    %222 = vmatpush1.msra.mxu0 %v184
    %223 = vmatprep.subr.mxu0 0.0
    %224 = vmatpush1.msra.mxu0 %v185
    %225 = vmatprep.subr.mxu0 0.0
    %226 = vmatpush1.msra.mxu0 0.0
    %227 = vmatprep.subr.mxu0 0.0
    %228 = vmatpush1.msra.mxu0 0.0
    %229 = vmatprep.subr.mxu0 0.0
    %230 = vmatpush1.msra.mxu0 0.0
    %231 = vmatprep.subr.mxu0 0.0
    %232 = vmatpush1.msra.mxu0 0.0
    %233 = vmatprep.subr.mxu0 0.0
    %234 = vmatpush1.msra.mxu0 0.0
    %235 = vmatprep.subr.mxu0 0.0
    %236 = vmatpush1.msra.mxu0 0.0
    %237 = vmatprep.subr.mxu0 0.0
    %238 = vmatpush1.msra.mxu0 0.0
    %239 = vmatprep.subr.mxu0 0.0
    %240 = vmatpush1.msra.mxu0 0.0
    %241 = vmatprep.subr.mxu0 0.0
    %242 = vmatpush1.msra.mxu0 0.0
    %243 = vmatprep.subr.mxu0 0.0
    %244 = vmatpush1.msra.mxu0 0.0
    %245 = vmatprep.subr.mxu0 0.0
    %246 = vmatpush1.msra.mxu0 0.0
    %247 = vmatprep.subr.mxu0 0.0
    %248 = vmatpush1.msra.mxu0 0.0
    %249 = vmatprep.subr.mxu0 0.0
    %250 = vmatpush1.msra.mxu0 0.0
    %251 = vmatprep.subr.mxu0 0.0
    %252 = vmatpush1.msra.mxu0 0.0
    %253 = vmatprep.subr.mxu0 0.0
    %254 = vmatpush1.msra.mxu0 0.0
    %255 = vmatprep.subr.mxu0 0.0
    %256 = vmatpush1.msra.mxu0 0.0
    %257 = vmatprep.mubr.f32.mxu0 0.0
    %258 = vmatmul.mubr.f32.gmra.mrb[0].mxu0 %v168
    %v259 = vpop.f32.mrb[0].mxu0
    %v260 = vadd.f32 %v191, %v259
    %v261 = vpop.f32.mrb[0].mxu0
    %262 = vmatprep.mubr.f32.mxu0 0.0
    %263 = vmatmul.mubr.f32.gmra.mrb[0].mxu0 %v169
    %v264 = vpop.f32.mrb[0].mxu0
    %v265 = vadd.f32 %v191, %v264
    %v266 = vpop.f32.mrb[0].mxu0
    %267 = vdwg.mxu0
    %v268 = vmax.f32 %v260, 0.0
    %v269 = vmax.f32 %v265, 0.0
    %v270 = vld [vmem:[#allocation4] sm:$0xff]
    %v271 = vld [vmem:[#allocation4 + $0x8] sm:$0xff]
    %v272 = vld [vmem:[#allocation4 + $0x10] sm:$0xff]
    %v273 = vld [vmem:[#allocation4 + $0x18] sm:$0xff]
    %v274 = vld [vmem:[#allocation4 + $0x20] sm:$0xff]
    %v275 = vld [vmem:[#allocation4 + $0x28] sm:$0xff]
    %v276 = vld [vmem:[#allocation4 + $0x30] sm:$0xff]
    %v277 = vld [vmem:[#allocation4 + $0x38] sm:$0xff]
    %v278 = vld [vmem:[#allocation4 + $0x40] sm:$0xff]
    %v279 = vld [vmem:[#allocation4 + $0x48] sm:$0xff]
    %v280 = vld [vmem:[#allocation4 + $0x50] sm:$0xff]
    %v281 = vld [vmem:[#allocation4 + $0x58] sm:$0xff]
    %v282 = vld [vmem:[#allocation4 + $0x60] sm:$0xff]
    %v283 = vld [vmem:[#allocation4 + $0x68] sm:$0xff]
    %v284 = vld [vmem:[#allocation4 + $0x70] sm:$0xff]
    %v285 = vld [vmem:[#allocation4 + $0x78] sm:$0xff]
    %v286 = vld [vmem:[%s6] sm:$0x1]
    %v288 = vlaneseq
    %v289 = vshrl.u32 %v288, 7
    %v290 = vsub.s32 0, %v289
    %v291 = vrot.slane %v286, %v290
    %293 = vmatprep.subr.mxu0 0.0
    %294 = vmatpush1.msra.mxu0 %v270
    %295 = vmatprep.subr.mxu0 0.0
    %296 = vmatpush1.msra.mxu0 %v271
    %297 = vmatprep.subr.mxu0 0.0
    %298 = vmatpush1.msra.mxu0 %v272
    %299 = vmatprep.subr.mxu0 0.0
    %300 = vmatpush1.msra.mxu0 %v273
    %301 = vmatprep.subr.mxu0 0.0
    %302 = vmatpush1.msra.mxu0 %v274
    %303 = vmatprep.subr.mxu0 0.0
    %304 = vmatpush1.msra.mxu0 %v275
    %305 = vmatprep.subr.mxu0 0.0
    %306 = vmatpush1.msra.mxu0 %v276
    %307 = vmatprep.subr.mxu0 0.0
    %308 = vmatpush1.msra.mxu0 %v277
    %309 = vmatprep.subr.mxu0 0.0
    %310 = vmatpush1.msra.mxu0 %v278
    %311 = vmatprep.subr.mxu0 0.0
    %312 = vmatpush1.msra.mxu0 %v279
    %313 = vmatprep.subr.mxu0 0.0
    %314 = vmatpush1.msra.mxu0 %v280
    %315 = vmatprep.subr.mxu0 0.0
    %316 = vmatpush1.msra.mxu0 %v281
    %317 = vmatprep.subr.mxu0 0.0
    %318 = vmatpush1.msra.mxu0 %v282
    %319 = vmatprep.subr.mxu0 0.0
    %320 = vmatpush1.msra.mxu0 %v283
    %321 = vmatprep.subr.mxu0 0.0
    %322 = vmatpush1.msra.mxu0 %v284
    %323 = vmatprep.subr.mxu0 0.0
    %324 = vmatpush1.msra.mxu0 %v285
    %325 = vmatprep.subr.mxu0 0.0
    %326 = vmatpush1.msra.mxu0 0.0
    %327 = vmatprep.subr.mxu0 0.0
    %328 = vmatpush1.msra.mxu0 0.0
    %329 = vmatprep.subr.mxu0 0.0
    %330 = vmatpush1.msra.mxu0 0.0
    %331 = vmatprep.subr.mxu0 0.0
    %332 = vmatpush1.msra.mxu0 0.0
    %333 = vmatprep.subr.mxu0 0.0
    %334 = vmatpush1.msra.mxu0 0.0
    %335 = vmatprep.subr.mxu0 0.0
    %336 = vmatpush1.msra.mxu0 0.0
    %337 = vmatprep.subr.mxu0 0.0
    %338 = vmatpush1.msra.mxu0 0.0
    %339 = vmatprep.subr.mxu0 0.0
    %340 = vmatpush1.msra.mxu0 0.0
    %341 = vmatprep.subr.mxu0 0.0
    %342 = vmatpush1.msra.mxu0 0.0
    %343 = vmatprep.subr.mxu0 0.0
    %344 = vmatpush1.msra.mxu0 0.0
    %345 = vmatprep.subr.mxu0 0.0
    %346 = vmatpush1.msra.mxu0 0.0
    %347 = vmatprep.subr.mxu0 0.0
    %348 = vmatpush1.msra.mxu0 0.0
    %349 = vmatprep.subr.mxu0 0.0
    %350 = vmatpush1.msra.mxu0 0.0
    %351 = vmatprep.subr.mxu0 0.0
    %352 = vmatpush1.msra.mxu0 0.0
    %353 = vmatprep.subr.mxu0 0.0
    %354 = vmatpush1.msra.mxu0 0.0
    %355 = vmatprep.subr.mxu0 0.0
    %356 = vmatpush1.msra.mxu0 0.0
    %357 = vmatprep.mubr.f32.mxu0 0.0
    %358 = vmatmul.mubr.f32.gmra.mrb[0].mxu0 %v268
    %v359 = vpop.f32.mrb[0].mxu0
    %v360 = vadd.f32 %v291, %v359
    %v361 = vpop.f32.mrb[0].mxu0
    %362 = vmatprep.mubr.f32.mxu0 0.0
    %363 = vmatmul.mubr.f32.gmra.mrb[0].mxu0 %v269
    %v364 = vpop.f32.mrb[0].mxu0
    %v365 = vadd.f32 %v291, %v364
    %v366 = vpop.f32.mrb[0].mxu0
    %367 = vdwg.mxu0
    %v368 = vld [vmem:[#allocation6] sm:$0xff]
    %v369 = vld [vmem:[#allocation6 + $0x8] sm:$0xff]
    %v370 = vld [vmem:[#allocation6 + $0x10] sm:$0xff]
    %v371 = vld [vmem:[#allocation6 + $0x18] sm:$0xff]
    %v372 = vld [vmem:[#allocation6 + $0x20] sm:$0xff]
    %v373 = vld [vmem:[#allocation6 + $0x28] sm:$0xff]
    %v374 = vld [vmem:[#allocation6 + $0x30] sm:$0xff]
    %v375 = vld [vmem:[#allocation6 + $0x38] sm:$0xff]
    %v376 = vld [vmem:[#allocation6 + $0x40] sm:$0xff]
    %v377 = vld [vmem:[#allocation6 + $0x48] sm:$0xff]
    %v378 = vld [vmem:[#allocation6 + $0x50] sm:$0xff]
    %v379 = vld [vmem:[#allocation6 + $0x58] sm:$0xff]
    %v380 = vld [vmem:[#allocation6 + $0x60] sm:$0xff]
    %v381 = vld [vmem:[#allocation6 + $0x68] sm:$0xff]
    %v382 = vld [vmem:[#allocation6 + $0x70] sm:$0xff]
    %v383 = vld [vmem:[#allocation6 + $0x78] sm:$0xff]
    %v384 = vld [vmem:[%s8] sm:$0x1]
    %v386 = vlaneseq
    %v387 = vshrl.u32 %v386, 7
    %v388 = vsub.s32 0, %v387
    %v389 = vrot.slane %v384, %v388
    %391 = vmatprep.subr.mxu0 0.0
    %392 = vmatpush1.msra.mxu0 %v368
    %393 = vmatprep.subr.mxu0 0.0
    %394 = vmatpush1.msra.mxu0 %v369
    %395 = vmatprep.subr.mxu0 0.0
    %396 = vmatpush1.msra.mxu0 %v370
    %397 = vmatprep.subr.mxu0 0.0
    %398 = vmatpush1.msra.mxu0 %v371
    %399 = vmatprep.subr.mxu0 0.0
    %400 = vmatpush1.msra.mxu0 %v372
    %401 = vmatprep.subr.mxu0 0.0
    %402 = vmatpush1.msra.mxu0 %v373
    %403 = vmatprep.subr.mxu0 0.0
    %404 = vmatpush1.msra.mxu0 %v374
    %405 = vmatprep.subr.mxu0 0.0
    %406 = vmatpush1.msra.mxu0 %v375
    %407 = vmatprep.subr.mxu0 0.0
    %408 = vmatpush1.msra.mxu0 %v376
    %409 = vmatprep.subr.mxu0 0.0
    %410 = vmatpush1.msra.mxu0 %v377
    %411 = vmatprep.subr.mxu0 0.0
    %412 = vmatpush1.msra.mxu0 %v378
    %413 = vmatprep.subr.mxu0 0.0
    %414 = vmatpush1.msra.mxu0 %v379
    %415 = vmatprep.subr.mxu0 0.0
    %416 = vmatpush1.msra.mxu0 %v380
    %417 = vmatprep.subr.mxu0 0.0
    %418 = vmatpush1.msra.mxu0 %v381
    %419 = vmatprep.subr.mxu0 0.0
    %420 = vmatpush1.msra.mxu0 %v382
    %421 = vmatprep.subr.mxu0 0.0
    %422 = vmatpush1.msra.mxu0 %v383
    %423 = vmatprep.subr.mxu0 0.0
    %424 = vmatpush1.msra.mxu0 0.0
    %425 = vmatprep.subr.mxu0 0.0
    %426 = vmatpush1.msra.mxu0 0.0
    %427 = vmatprep.subr.mxu0 0.0
    %428 = vmatpush1.msra.mxu0 0.0
    %429 = vmatprep.subr.mxu0 0.0
    %430 = vmatpush1.msra.mxu0 0.0
    %431 = vmatprep.subr.mxu0 0.0
    %432 = vmatpush1.msra.mxu0 0.0
    %433 = vmatprep.subr.mxu0 0.0
    %434 = vmatpush1.msra.mxu0 0.0
    %435 = vmatprep.subr.mxu0 0.0
    %436 = vmatpush1.msra.mxu0 0.0
    %437 = vmatprep.subr.mxu0 0.0
    %438 = vmatpush1.msra.mxu0 0.0
    %439 = vmatprep.subr.mxu0 0.0
    %440 = vmatpush1.msra.mxu0 0.0
    %441 = vmatprep.subr.mxu0 0.0
    %442 = vmatpush1.msra.mxu0 0.0
    %443 = vmatprep.subr.mxu0 0.0
    %444 = vmatpush1.msra.mxu0 0.0
    %445 = vmatprep.subr.mxu0 0.0
    %446 = vmatpush1.msra.mxu0 0.0
    %447 = vmatprep.subr.mxu0 0.0
    %448 = vmatpush1.msra.mxu0 0.0
    %449 = vmatprep.subr.mxu0 0.0
    %450 = vmatpush1.msra.mxu0 0.0
    %451 = vmatprep.subr.mxu0 0.0
    %452 = vmatpush1.msra.mxu0 0.0
    %453 = vmatprep.subr.mxu0 0.0
    %454 = vmatpush1.msra.mxu0 0.0
    %455 = vmatprep.mubr.f32.mxu0 0.0
    %456 = vmatmul.mubr.f32.gmra.mrb[0].mxu0 %v360
    %v457 = vpop.f32.mrb[0].mxu0
    %v458 = vadd.f32 %v389, %v457
    %v459 = vpop.f32.mrb[0].mxu0
    %460 = vmatprep.mubr.f32.mxu0 0.0
    %461 = vmatmul.mubr.f32.gmra.mrb[0].mxu0 %v365
    %v462 = vpop.f32.mrb[0].mxu0
    %v463 = vadd.f32 %v389, %v462
    %v464 = vpop.f32.mrb[0].mxu0
    %465 = vdwg.mxu0
    %v466 = vld [vmem:[%s9] sm:$0x1]
    %vm467 = vcmp.gt.f32.partialorder %v466, 0.0
    %v468 = vmax.f32 %v458, 0.0
    %v469 = vmax.f32 %v463, 0.0
    %vm470 = vcmp.ne.f32.partialorder %v458, %v458
    %vm471 = vcmp.ne.f32.partialorder %v463, %v463
    %v472 = vadd.f32 %v458, 0.0
    %v473 = vadd.f32 %v463, 0.0
    %v474 = vand.u32 2147483647, %v458
    %v475 = vand.u32 2147483647, %v463
    %v476 = vsub.f32 0.0, %v474
    %v477 = vsub.f32 0.0, %v475
    %v478 = vmul.f32 %v476, 1.442695
    %v479 = vpow.pop %v478
    %v480 = vmul.f32 %v477, 1.442695
    %v481 = vpow.pop %v480
    %v482 = vadd.f32 %v479, 1.0
    %v483 = vlog2.pop %v482
    %v484 = vmul.f32 %v483, 0.6931472
    %v485 = vmul.f32 -0.5, %v479
    %v486 = vadd.f32 %v485, 1.0
    %v487 = vmul.f32 %v486, %v479
    %v488 = vand.u32 2147483647, %v479
    %vm489 = vcmp.lt.f32.partialorder %v488, 0.0004427343
    %v490 = vsel %vm489, %v487, %v484
    %v491 = vadd.f32 %v481, 1.0
    %v492 = vlog2.pop %v491
    %v493 = vmul.f32 %v492, 0.6931472
    %v494 = vmul.f32 -0.5, %v481
    %v495 = vadd.f32 %v494, 1.0
    %v496 = vmul.f32 %v495, %v481
    %v497 = vand.u32 2147483647, %v481
    %vm498 = vcmp.lt.f32.partialorder %v497, 0.0004427343
    %v499 = vsel %vm498, %v496, %v493
    %v500 = vadd.f32 %v468, %v490
    %v501 = vadd.f32 %v469, %v499
    %v502 = vsel %vm470, %v472, %v500
    %v503 = vsel %vm471, %v473, %v501
    %v504 = vsel %vm467, 1, 0
    %v505 = vlaneseq
    %v506 = vshrl.u32 %v505, 7
    %v507 = vsub.s32 0, %v506
    %v508 = vrot.slane %v504, %v507
    %vm509 = vcmp.eq.s32.totalorder %v508, 1
    %v510 = vsel %vm509, %v502, %v458
    %v511 = vsel %vm509, %v503, %v463
    %512 = vst [vmem:[%s10] sm:$0xff] %v510
    %513 = vst [vmem:[%s10 + $0x8] sm:$0xff] %v511
    // Predicated region
    $region54: #{anchored_batch_ensemble_forward.1} parent=1 // pred_check
      _
    $region55: #{anchored_batch_ensemble_forward.1} parent=1 // pred_check_branch
      %515 = sbr.rel (0) target = $region57
    $region56: #{anchored_batch_ensemble_forward.1} parent=1 // pred_region
      _
    $region57: #{anchored_batch_ensemble_forward.1} parent=1 // pred_fallthru
      _
    // Predicated region
    $region58: #{anchored_batch_ensemble_forward.1} parent=1 // pred_check
      _
    $region59: #{anchored_batch_ensemble_forward.1} parent=1 // pred_check_branch
      %517 = sbr.rel (0) target = $region61
    $region60: #{anchored_batch_ensemble_forward.1} parent=1 // pred_region
      _
    $region61: #{anchored_batch_ensemble_forward.1} parent=1 // pred_fallthru
      _
    %518 = vsyncpa [#allocation3], 1
    %519 = vsyncpa [#allocation5], 1

</llo_original>
